<compile_context>
chip_gen: v7x
topology: tpu7x:2x2x1
jax: 0.10.0
libtpu: 0.0.40
codegen_flags: <defaults>
</compile_context>

<pallas_src>
import jax
import jax.numpy as jnp
from jax.experimental import pallas as pl
from jax.experimental.pallas import tpu as pltpu

# Split sizes along the last (W) dimension, as in the PyTorch module.
SPLIT_SIZES = (12, 8, 95, 111)
W_TOTAL = sum(SPLIT_SIZES)  # 226


def _identity_copy_kernel(x_hbm, o_hbm, sem):
    # split(dim=3) + same-order cat == identity, so the whole op is one
    # HBM->HBM DMA of the full (contiguous) array.  No VMEM staging, no
    # vld/vst work on the TensorCore, no grid, no lane-density concerns.
    cp = pltpu.make_async_copy(x_hbm, o_hbm, sem)
    cp.start()
    cp.wait()


def split_cat(x, *, materialize=True):
    """Forward pass of the PyTorch Model.

    x: (N, C, H, W) with W == sum(SPLIT_SIZES) == 226.
    Returns an array with the same shape/dtype/values as x.

    materialize=False returns x directly (the mathematically optimal
    implementation: zero HBM traffic).  materialize=True (default) produces a
    fresh output buffer via a single HBM->HBM DMA inside a Pallas kernel.
    """
    n, c, h, w = x.shape
    assert w == W_TOTAL, f"last dim must be {W_TOTAL}, got {w}"

    if not materialize:
        # Same-order split+cat is the identity; skip the copy entirely.
        return x

    bytes_accessed = 2 * x.size * jnp.dtype(x.dtype).itemsize  # read + write

    return pl.pallas_call(
        _identity_copy_kernel,
        out_shape=jax.ShapeDtypeStruct(x.shape, x.dtype),
        # Keep both operands in HBM; the kernel moves data with an explicit
        # DMA instead of BlockSpec-pipelined VMEM tiles.
        in_specs=[pl.BlockSpec(memory_space=pl.ANY)],
        out_specs=pl.BlockSpec(memory_space=pl.ANY),
        scratch_shapes=[pltpu.SemaphoreType.DMA(())],
        cost_estimate=pl.CostEstimate(
            flops=0, transcendentals=0, bytes_accessed=bytes_accessed),
    )(x)


if __name__ == "__main__":
    key = jax.random.PRNGKey(0)

    # Shape consistent with the module's forward: last dim = 12+8+95+111 = 226.
    x1 = jax.random.normal(key, (1, 1, 56, W_TOTAL), dtype=jnp.float32)
    out = split_cat(x1)
    jax.block_until_ready(out)

    # Reference: split + same-order cat is an identity copy.
    ref = jnp.concatenate(jnp.split(x1, (12, 20, 115), axis=3), axis=3)
    assert out.shape == x1.shape
    assert out.dtype == x1.dtype
    assert bool(jnp.array_equal(out, ref)), "mismatch vs reference (small case)"

    # Larger case: exercises a multi-MiB single-DMA copy.
    x_big = jax.random.normal(
        jax.random.PRNGKey(1), (2, 4, 64, W_TOTAL), dtype=jnp.float32)
    out_big = split_cat(x_big)
    jax.block_until_ready(out_big)
    assert bool(jnp.array_equal(out_big, x_big)), "mismatch vs reference (big case)"

    # Zero-copy path (the recommended form inside a larger fused model).
    out_alias = split_cat(x1, materialize=False)
    assert out_alias is x1

    print("KERNEL_OK")
</pallas_src>

<mosaic_0001>
module attributes {stable_mosaic.version = 11 : i64} {
  func.func @_identity_copy_kernel(%arg0: memref<1x1x56x226xf32, #tpu.memory_space<any>>, %arg1: memref<1x1x56x226xf32, #tpu.memory_space<any>>, %arg2: memref<!tpu.dma_semaphore, #tpu.memory_space<semaphore_mem>>) attributes {dimension_semantics = [], scalar_prefetch = 0 : i64, scratch_operands = 1 : i64, tpu.core_type = #tpu.core_type<tc>} {
    tpu.enqueue_dma source(%arg0 : memref<1x1x56x226xf32, #tpu.memory_space<any>>) target(%arg1 : memref<1x1x56x226xf32, #tpu.memory_space<any>>) target_semaphore(%arg2 : memref<!tpu.dma_semaphore, #tpu.memory_space<semaphore_mem>>)
    tpu.wait_dma2 semaphore(%arg2 : memref<!tpu.dma_semaphore, #tpu.memory_space<semaphore_mem>>) src(%arg0 : memref<1x1x56x226xf32, #tpu.memory_space<any>>) dst(%arg1 : memref<1x1x56x226xf32, #tpu.memory_space<any>>)
    return
  }
}

</mosaic_0001>

<llo_original>
// kernel: tpu_custom_call.1
$region0: #{tpu_custom_call.1}
  #allocation0 [shape = 'u32[]', space=smem, size = 0x4, offset = 0x4, fixed_abs, tag = 'smem constant byte address 0x4 - core index']
  #allocation1 [shape = 'u32[144,128]{1,0:T(1,128)}', space=vmem, size = 0x12000, scoped, tag = 'internal scratch']
  #allocation2 [shape = 's32[1]{0}', space=sflag, size = 0x4, scoped, tag = 'scratch operand']
  #allocation3 [shape = 's32[]', space=sflag, size = 0x4, offset = 0, fixed_abs, tag = 'sflag constant byte address 0x0 - dummy sync flag']
  #allocation4 [shape = 'u32[0]{0}', space=smem, size = 0, offset = 0, fixed_abs, tag = 'smem constant byte address 0x0 - null']
  %s0 = inlined_call_operand.hbm [shape: f32[1,1,56,226], index: 0, kind: input, shape index: {}]
  %s1 = inlined_call_operand.hbm [shape: f32[1,1,56,226], index: 1, kind: output, shape index: {}]
  %s2 = sld [smem:[#allocation0]]
  $region2: #{tpu_custom_call.1} parent=0
    _
  %s4 = ssub.s32 1, %s2
  %s5 = scalar_select 0, %s4, %s2
  %s7 = sshll.u32 1, 14
  %s8 = sxor.u32 4294967295, %s7
  %s11 = sshll.u32 3, 24
  %s12 = sxor.u32 4294967295, %s11
  %s13 = sand.u32 0, %s12
  %s15 = sor.u32 %s13, 0
  %18 = dma.general %s0, 1792, %s1, [#allocation2], [#allocation3], [#allocation4], %s15, 0
  %s19 = smul.u32 8, 1
  %s20 = smul.u32 %s19, 1
  %s21 = smul.u32 %s20, 7
  %s22 = smul.u32 %s21, 2
  %s23 = sshll.u32 %s22, 4
  %24 = dma.done [#allocation2], %s23
  %25 = vsyncmov [#allocation2]
  %s26 = vpop.sfrf %25
  %p27 = scmp.eq.s32.totalorder %s26, 0
  %p28 = pneg %p27
  %30 = shalt.err (%p28)

</llo_original>
